<compile_context>
chip_gen: v7x
topology: tpu7x:2x2x1
jax: 0.10.0
libtpu: 0.0.40
codegen_flags: <defaults>
</compile_context>

<pallas_src>
import math

import jax
import jax.numpy as jnp
from jax import lax
from jax.experimental import pallas as pl
from jax.experimental.pallas import tpu as pltpu


def _round_up(x, m):
    return ((x + m - 1) // m) * m


def twin_regressor_kernel(x1_ref, x2_ref,
                          w1_ref, b1_ref,
                          w2_ref, b2_ref,
                          wgt_ref, bg_ref,
                          o_ref):
    """One batch tile, fully in VMEM.

    x1_ref, x2_ref : (tb, in_dim)        f32
    w1_ref         : (in_dim, 128)       matmul dtype (bf16 or f32)
    b1_ref         : (1, 128)            f32
    w2_ref         : (128, rep_dim)      matmul dtype
    b2_ref         : (1, rep_dim)        f32
    wgt_ref        : (out_dim, rep_dim)  f32  (head weight, pre-transposed)
    bg_ref         : (1, out_dim)        f32
    o_ref          : (tb, out_dim)       f32
    """
    tb = x1_ref.shape[0]
    out_dim = wgt_ref.shape[0]
    mm_dtype = w1_ref.dtype

    # Hoist all (VMEM-resident) weights / biases once.
    w1 = w1_ref[...]
    b1 = b1_ref[...]
    w2 = w2_ref[...]
    b2 = b2_ref[...]
    wgt = wgt_ref[...]
    bg = bg_ref[...]

    # Fuse the two twin inputs into one (2*tb, in_dim) matrix so the shared
    # trunk runs as a single matmul per layer (double M on the MXU).
    x = jnp.concatenate([x1_ref[...], x2_ref[...]], axis=0).astype(mm_dtype)

    z1 = jnp.dot(x, w1, preferred_element_type=jnp.float32) + b1
    z1 = jnp.maximum(z1, 0.0)                                   # f32 epilogue

    z2 = jnp.dot(z1.astype(mm_dtype), w2,
                 preferred_element_type=jnp.float32) + b2
    z2 = jnp.maximum(z2, 0.0)                                   # (2*tb, rep)

    diff = z2[:tb] - z2[tb:]                                    # static, tile-aligned

    if out_dim == 1:
        # Head: N=1 matmul wastes the MXU -> VPU multiply + lane reduction.
        out = jnp.sum(diff * wgt, axis=-1, keepdims=True) + bg
    else:
        # General head: contract rep_dim without materializing a transpose.
        out = lax.dot_general(diff, wgt, (((1,), (1,)), ((), ())),
                              preferred_element_type=jnp.float32) + bg

    o_ref[...] = out.astype(o_ref.dtype)


def _vmem_bytes_estimate(tb, in_dim, hidden, rep_dim, out_dim, mm_bytes):
    x_io = 2 * 2 * tb * in_dim * 4                    # x1,x2, double-buffered, f32
    acts = 2 * tb * (in_dim * mm_bytes                # fused/cast x copy
                     + hidden * (4 + mm_bytes)        # z1 (f32) + cast copy
                     + rep_dim * 4)                   # z2 (f32)
    acts += tb * rep_dim * 4                          # diff
    w = (in_dim * hidden + hidden * rep_dim) * mm_bytes
    w += rep_dim * out_dim * 4 + (hidden + rep_dim + out_dim) * 4
    out_io = 2 * tb * out_dim * 4
    return x_io + acts + 2 * w + out_io


def twin_regressor(x1, x2, params, *, tb=256, matmul_dtype=jnp.bfloat16):
    """params = dict with w1,b1,w2,b2,wg,bg (see kernel docstring for shapes)."""
    B, in_dim = x1.shape
    hidden = params["w1"].shape[1]
    rep_dim = params["w2"].shape[1]
    out_dim = params["wg"].shape[1]

    # Tile: multiple of 8 sublanes, no bigger than the (padded) batch.
    tb = max(8, min(_round_up(tb, 8), _round_up(B, 8)))
    Bp = _round_up(B, tb)
    if Bp != B:
        pad = Bp - B
        x1 = jnp.pad(x1, ((0, pad), (0, 0)))
        x2 = jnp.pad(x2, ((0, pad), (0, 0)))

    # One-time wrapper-side layout / dtype prep (weights stay resident in VMEM).
    w1 = params["w1"].astype(matmul_dtype)
    w2 = params["w2"].astype(matmul_dtype)
    b1 = params["b1"].reshape(1, hidden).astype(jnp.float32)
    b2 = params["b2"].reshape(1, rep_dim).astype(jnp.float32)
    wgt = params["wg"].T.astype(jnp.float32)            # (out_dim, rep_dim)
    bg = params["bg"].reshape(1, out_dim).astype(jnp.float32)

    rep = lambda shape: pl.BlockSpec(shape, lambda i: (0, 0))  # replicated

    mm_bytes = jnp.dtype(matmul_dtype).itemsize
    est = _vmem_bytes_estimate(tb, in_dim, hidden, rep_dim, out_dim, mm_bytes)
    vmem_limit = int(min(64 * 2**20, max(16 * 2**20, 4 * est)))

    out = pl.pallas_call(
        twin_regressor_kernel,
        out_shape=jax.ShapeDtypeStruct((Bp, out_dim), jnp.float32),
        grid_spec=pl.GridSpec(
            grid=(Bp // tb,),
            in_specs=[
                pl.BlockSpec((tb, in_dim), lambda i: (i, 0)),   # x1 tile
                pl.BlockSpec((tb, in_dim), lambda i: (i, 0)),   # x2 tile
                rep((in_dim, hidden)),                          # w1
                rep((1, hidden)),                               # b1
                rep((hidden, rep_dim)),                         # w2
                rep((1, rep_dim)),                              # b2
                rep((out_dim, rep_dim)),                        # wg^T
                rep((1, out_dim)),                              # bg
            ],
            out_specs=pl.BlockSpec((tb, out_dim), lambda i: (i, 0)),
        ),
        compiler_params=pltpu.CompilerParams(
            dimension_semantics=("parallel",),
            vmem_limit_bytes=vmem_limit),
    )(x1, x2, w1, b1, w2, b2, wgt, bg)

    return out[:B]


def init_params(key, in_dim, rep_dim=64, out_dim=1, hidden=128):
    """Deterministic PyTorch-style (uniform +/- 1/sqrt(fan_in)) init."""
    ks = jax.random.split(key, 6)

    def lin(kw, kb, fan_in, fan_out):
        bound = 1.0 / math.sqrt(fan_in)
        w = jax.random.uniform(kw, (fan_in, fan_out), jnp.float32, -bound, bound)
        b = jax.random.uniform(kb, (fan_out,), jnp.float32, -bound, bound)
        return w, b

    w1, b1 = lin(ks[0], ks[1], in_dim, hidden)
    w2, b2 = lin(ks[2], ks[3], hidden, rep_dim)
    wg, bg = lin(ks[4], ks[5], rep_dim, out_dim)
    return {"w1": w1, "b1": b1, "w2": w2, "b2": b2, "wg": wg, "bg": bg}


def reference_forward(x1, x2, p):
    def h(x):
        z = jnp.maximum(x @ p["w1"] + p["b1"], 0.0)
        return jnp.maximum(z @ p["w2"] + p["b2"], 0.0)
    return (h(x1) - h(x2)) @ p["wg"] + p["bg"]


if __name__ == "__main__":
    key = jax.random.PRNGKey(0)
    k_p, k_x1, k_x2 = jax.random.split(key, 3)

    in_dim, rep_dim, out_dim = 32, 64, 1
    params = init_params(k_p, in_dim, rep_dim=rep_dim, out_dim=out_dim)

    # Case 1: batch = 2 tiles (keeps both v7x TensorCores busy), strict f32 check.
    B = 256
    x1 = jax.random.normal(k_x1, (B, in_dim), jnp.float32)
    x2 = jax.random.normal(k_x2, (B, in_dim), jnp.float32)
    ref = reference_forward(x1, x2, params)

    out_f32 = jax.block_until_ready(
        twin_regressor(x1, x2, params, tb=128, matmul_dtype=jnp.float32))
    assert out_f32.shape == (B, out_dim)
    assert jnp.allclose(out_f32, ref, atol=1e-4, rtol=1e-4), "f32 mismatch vs reference"

    # Case 2: default bf16 MXU inputs with f32 accumulation (looser tolerance).
    out_bf16 = jax.block_until_ready(twin_regressor(x1, x2, params, tb=128))
    assert out_bf16.shape == (B, out_dim)
    assert jnp.allclose(out_bf16, ref, atol=5e-2, rtol=5e-2), "bf16 mismatch vs reference"

    # Case 3: ragged batch exercises the padding / remainder path.
    B2 = 200
    x1r, x2r = x1[:B2], x2[:B2]
    out_r = jax.block_until_ready(
        twin_regressor(x1r, x2r, params, tb=128, matmul_dtype=jnp.float32))
    assert out_r.shape == (B2, out_dim)
    assert jnp.allclose(out_r, reference_forward(x1r, x2r, params),
                        atol=1e-4, rtol=1e-4), "ragged-batch mismatch vs reference"

    print("KERNEL_OK")
</pallas_src>

<mosaic_0001>
module attributes {stable_mosaic.version = 11 : i64} {
  func.func @twin_regressor_kernel(%arg0: i32, %arg1: memref<128x32xf32, #tpu.memory_space<vmem>>, %arg2: memref<128x32xf32, #tpu.memory_space<vmem>>, %arg3: memref<32x128xf32, #tpu.memory_space<vmem>>, %arg4: memref<1x128xf32, #tpu.memory_space<vmem>>, %arg5: memref<128x64xf32, #tpu.memory_space<vmem>>, %arg6: memref<1x64xf32, #tpu.memory_space<vmem>>, %arg7: memref<1x64xf32, #tpu.memory_space<vmem>>, %arg8: memref<1x1xf32, #tpu.memory_space<vmem>>, %arg9: memref<128x1xf32, #tpu.memory_space<vmem>>) attributes {dimension_semantics = [#tpu.dimension_semantics<parallel>], iteration_bounds = array<i64: 2>, scalar_prefetch = 0 : i64, scratch_operands = 0 : i64, tpu.core_type = #tpu.core_type<tc>, window_params = [{transform_indices = @transform_0, window_bounds = array<i64: 128, 32>}, {transform_indices = @transform_1, window_bounds = array<i64: 128, 32>}, {pipeline_mode = #tpu.pipeline_mode<synchronous>, transform_indices = @transform_2, window_bounds = array<i64: 32, 128>}, {pipeline_mode = #tpu.pipeline_mode<synchronous>, transform_indices = @transform_3, window_bounds = array<i64: 1, 128>}, {pipeline_mode = #tpu.pipeline_mode<synchronous>, transform_indices = @transform_4, window_bounds = array<i64: 128, 64>}, {pipeline_mode = #tpu.pipeline_mode<synchronous>, transform_indices = @transform_5, window_bounds = array<i64: 1, 64>}, {pipeline_mode = #tpu.pipeline_mode<synchronous>, transform_indices = @transform_6, window_bounds = array<i64: 1, 64>}, {pipeline_mode = #tpu.pipeline_mode<synchronous>, transform_indices = @transform_7, window_bounds = array<i64: 1, 1>}, {transform_indices = @transform_8, window_bounds = array<i64: 128, 1>}]} {
    %c0 = arith.constant 0 : index
    %c0_0 = arith.constant 0 : index
    %0 = vector.load %arg3[%c0, %c0_0] : memref<32x128xf32, #tpu.memory_space<vmem>>, vector<32x128xf32>
    %c0_1 = arith.constant 0 : index
    %c0_2 = arith.constant 0 : index
    %1 = vector.load %arg4[%c0_1, %c0_2] : memref<1x128xf32, #tpu.memory_space<vmem>>, vector<1x128xf32>
    %c0_3 = arith.constant 0 : index
    %c0_4 = arith.constant 0 : index
    %2 = vector.load %arg5[%c0_3, %c0_4] : memref<128x64xf32, #tpu.memory_space<vmem>>, vector<128x64xf32>
    %c0_5 = arith.constant 0 : index
    %c0_6 = arith.constant 0 : index
    %3 = vector.load %arg6[%c0_5, %c0_6] : memref<1x64xf32, #tpu.memory_space<vmem>>, vector<1x64xf32>
    %c0_7 = arith.constant 0 : index
    %c0_8 = arith.constant 0 : index
    %4 = vector.load %arg7[%c0_7, %c0_8] : memref<1x64xf32, #tpu.memory_space<vmem>>, vector<1x64xf32>
    %c0_9 = arith.constant 0 : index
    %c0_10 = arith.constant 0 : index
    %5 = vector.load %arg8[%c0_9, %c0_10] : memref<1x1xf32, #tpu.memory_space<vmem>>, vector<1x1xf32>
    %c0_11 = arith.constant 0 : index
    %c0_12 = arith.constant 0 : index
    %6 = vector.load %arg1[%c0_11, %c0_12] : memref<128x32xf32, #tpu.memory_space<vmem>>, vector<128x32xf32>
    %c0_13 = arith.constant 0 : index
    %c0_14 = arith.constant 0 : index
    %7 = vector.load %arg2[%c0_13, %c0_14] : memref<128x32xf32, #tpu.memory_space<vmem>>, vector<128x32xf32>
    %8 = tpu.concatenate %6, %7 in 0 : vector<128x32xf32>, vector<128x32xf32> -> vector<256x32xf32>
    %cst = arith.constant dense<0.000000e+00> : vector<256x128xf32>
    %9 = tpu.matmul %8, %0, %cst {dimension_numbers = #tpu.dot_dimension_numbers<[1], [0], [0], [1], [0, 0, 1, 1], [], []>} : vector<256x32xf32>, vector<32x128xf32>, vector<256x128xf32> -> vector<256x128xf32>
    %10 = vector.broadcast %1 : vector<1x128xf32> to vector<256x128xf32>
    %11 = arith.addf %9, %10 : vector<256x128xf32>
    %cst_15 = arith.constant 0.000000e+00 : f32
    %12 = vector.broadcast %cst_15 : f32 to vector<256x128xf32>
    %13 = arith.maximumf %11, %12 : vector<256x128xf32>
    %cst_16 = arith.constant dense<0.000000e+00> : vector<256x64xf32>
    %14 = tpu.matmul %13, %2, %cst_16 {dimension_numbers = #tpu.dot_dimension_numbers<[1], [0], [0], [1], [0, 0, 1, 1], [], []>} : vector<256x128xf32>, vector<128x64xf32>, vector<256x64xf32> -> vector<256x64xf32>
    %15 = vector.broadcast %3 : vector<1x64xf32> to vector<256x64xf32>
    %16 = arith.addf %14, %15 : vector<256x64xf32>
    %cst_17 = arith.constant 0.000000e+00 : f32
    %17 = vector.broadcast %cst_17 : f32 to vector<256x64xf32>
    %18 = arith.maximumf %16, %17 : vector<256x64xf32>
    %19 = vector.extract_strided_slice %18 {offsets = [0, 0], sizes = [128, 64], strides = [1, 1]} : vector<256x64xf32> to vector<128x64xf32>
    %20 = vector.extract_strided_slice %18 {offsets = [128, 0], sizes = [128, 64], strides = [1, 1]} : vector<256x64xf32> to vector<128x64xf32>
    %21 = arith.subf %19, %20 : vector<128x64xf32>
    %22 = vector.broadcast %4 : vector<1x64xf32> to vector<128x64xf32>
    %23 = arith.mulf %21, %22 : vector<128x64xf32>
    %cst_18 = arith.constant dense<0.000000e+00> : vector<128xf32>
    %24 = vector.multi_reduction <add>, %23, %cst_18 [1] : vector<128x64xf32> to vector<128xf32>
    %25 = vector.shape_cast %24 : vector<128xf32> to vector<128x1xf32>
    %26 = vector.broadcast %5 : vector<1x1xf32> to vector<128x1xf32>
    %27 = arith.addf %25, %26 : vector<128x1xf32>
    %c0_19 = arith.constant 0 : index
    %c0_20 = arith.constant 0 : index
    %28 = vector.load %arg9[%c0_19, %c0_20] : memref<128x1xf32, #tpu.memory_space<vmem>>, vector<128x1xf32>
    tpu.vector_store %arg9[%c0_19, %c0_20], %27 {strides = array<i32>} : memref<128x1xf32, #tpu.memory_space<vmem>>, vector<128x1xf32>,
    return
  }
  func.func @transform_0(%arg0: i32) -> (i32, i32) {
    %c0_i32 = arith.constant 0 : i32
    %c0_i32_0 = arith.constant 0 : i32
    return %arg0, %c0_i32 : i32, i32
  }
  func.func @transform_1(%arg0: i32) -> (i32, i32) {
    %c0_i32 = arith.constant 0 : i32
    %c0_i32_0 = arith.constant 0 : i32
    return %arg0, %c0_i32 : i32, i32
  }
  func.func @transform_2(%arg0: i32) -> (i32, i32) {
    %c0_i32 = arith.constant 0 : i32
    %c0_i32_0 = arith.constant 0 : i32
    %c0_i32_1 = arith.constant 0 : i32
    return %c0_i32, %c0_i32_0 : i32, i32
  }
  func.func @transform_3(%arg0: i32) -> (i32, i32) {
    %c0_i32 = arith.constant 0 : i32
    %c0_i32_0 = arith.constant 0 : i32
    %c0_i32_1 = arith.constant 0 : i32
    return %c0_i32, %c0_i32_0 : i32, i32
  }
  func.func @transform_4(%arg0: i32) -> (i32, i32) {
    %c0_i32 = arith.constant 0 : i32
    %c0_i32_0 = arith.constant 0 : i32
    %c0_i32_1 = arith.constant 0 : i32
    return %c0_i32, %c0_i32_0 : i32, i32
  }
  func.func @transform_5(%arg0: i32) -> (i32, i32) {
    %c0_i32 = arith.constant 0 : i32
    %c0_i32_0 = arith.constant 0 : i32
    %c0_i32_1 = arith.constant 0 : i32
    return %c0_i32, %c0_i32_0 : i32, i32
  }
  func.func @transform_6(%arg0: i32) -> (i32, i32) {
    %c0_i32 = arith.constant 0 : i32
    %c0_i32_0 = arith.constant 0 : i32
    %c0_i32_1 = arith.constant 0 : i32
    return %c0_i32, %c0_i32_0 : i32, i32
  }
  func.func @transform_7(%arg0: i32) -> (i32, i32) {
    %c0_i32 = arith.constant 0 : i32
    %c0_i32_0 = arith.constant 0 : i32
    %c0_i32_1 = arith.constant 0 : i32
    return %c0_i32, %c0_i32_0 : i32, i32
  }
  func.func @transform_8(%arg0: i32) -> (i32, i32) {
    %c0_i32 = arith.constant 0 : i32
    %c0_i32_0 = arith.constant 0 : i32
    return %arg0, %c0_i32 : i32, i32
  }
}

</mosaic_0001>

<llo_original>
// kernel: tpu_custom_call.1
$region0: #{tpu_custom_call.1}
  #allocation0 [shape = 'u32[]', space=smem, size = 0x4, offset = 0x4, fixed_abs, tag = 'smem constant byte address 0x4 - core index']
  #allocation1 [shape = 'u32[144,128]{1,0:T(1,128)}', space=vmem, size = 0x12000, scoped, tag = 'internal scratch']
  #allocation2 [shape = 'f32[1,1]{1,0:T(1,128)S(1)}', space=vmem, size = 0x200, scoped, tag = 'scoped memory for tpu_custom_call.1']
  %s0 = inlined_call_operand.vmem [shape: f32[256,32], index: 0, kind: input, shape index: {}]
  %s1 = inlined_call_operand.vmem [shape: f32[256,32], index: 1, kind: input, shape index: {}]
  %s2 = inlined_call_operand.vmem [shape: f32[32,128], index: 2, kind: input, shape index: {}]
  %s3 = inlined_call_operand.vmem [shape: f32[1,128], index: 3, kind: input, shape index: {}]
  %s4 = inlined_call_operand.vmem [shape: f32[128,64], index: 4, kind: input, shape index: {}]
  %s5 = inlined_call_operand.vmem [shape: f32[1,64], index: 5, kind: input, shape index: {}]
  %s6 = inlined_call_operand.vmem [shape: f32[1,64], index: 6, kind: input, shape index: {}]
  %s7 = inlined_call_operand.<no memory space> [shape: f32[1,1], index: 7, kind: input, shape index: {}]
  %s8 = inlined_call_operand.vmem [shape: f32[256,1], index: 8, kind: output, shape index: {}]
  %s9 = sld [smem:[#allocation0]]
  $region65: #{tpu_custom_call.1} parent=0
    _
  %s11 = ssub.s32 1, %s9
  %s12 = scalar_select 0, %s11, %s9
  %v13 = vstv %s7
  %14 = vst [vmem:[#allocation2] sm:$0x1] %v13
  loop: start=0, step=1, limit=4
  $region2: #{tpu_custom_call.1} parent=0 // loop_pre_header
    _
  $region3: #{tpu_custom_call.1} parent=0 // loop_header
    %s16 = sphi 0, %s20
    %p17 = scmp.ge.s32.totalorder %s16, 4
    %s26 = sphi 0, %s28
    %s29 = sphi 0, %s26
    %s30 = sphi 0, %s29
    %s46 = sphi 0, %s30
    %s52 = sphi 0, %s54
    %s55 = sphi 0, %s52
    %s56 = sphi 0, %s55
    %s72 = sphi 0, %s56
    %s76 = sphi 0, %s76
    %s78 = sphi 0, %s76
    %s79 = sphi 0, %s78
    %s93 = sphi 0, %s79
    %s97 = sphi 0, %s97
    %s99 = sphi 0, %s97
    %s100 = sphi 0, %s99
    %s114 = sphi 0, %s100
    %s118 = sphi 0, %s118
    %s120 = sphi 0, %s118
    %s121 = sphi 0, %s120
    %s135 = sphi 0, %s121
    %s139 = sphi 0, %s139
    %s141 = sphi 0, %s139
    %s142 = sphi 0, %s141
    %s156 = sphi 0, %s142
    %s160 = sphi 0, %s160
    %s162 = sphi 0, %s160
    %s163 = sphi 0, %s162
    %s177 = sphi 0, %s163
    %s181 = sphi 0, %s181
    %s183 = sphi 0, %s181
    %s184 = sphi 0, %s183
    %s198 = sphi 0, %s184
    %s204 = sphi 0, %s206
    %s207 = sphi 0, %s204
    %s208 = sphi 0, %s207
    %s224 = sphi 0, %s208
  $region4: #{tpu_custom_call.1} parent=0 // loop_header_branch
    %19 = sbr.rel (%p17) target = $region8
  $region5: #{tpu_custom_call.1} parent=0 // loop_body
    %s21 = ssub.s32 %s16, 1
    %s22 = ssub.s32 %s16, 2
    %s23 = sadd.s32 %s16, 1
    %s24 = ssub.s32 %s16, %s23
    %p25 = scmp.eq.s32.totalorder %s24, 0
    %s27 = sadd.s32 %s26, 1
    %s28 = scalar_select %p25, %s26, %s27
    %p31 = pneg %p25
    %p32 = scmp.eq.s32.totalorder %s16, 1
    %p33 = por %p31, %p32
    %p34 = scmp.ne.s32.totalorder %s26, %s29
    %p35 = scmp.eq.s32.totalorder %s16, 0
    %p36 = por %p34, %p35
    %p37 = scmp.ne.s32.totalorder %s26, %s29
    %p38 = scmp.eq.s32.totalorder %s21, 1
    %p39 = por %p37, %p38
    %p40 = scmp.ne.s32.totalorder %s29, %s30
    %p41 = scmp.eq.s32.totalorder %s21, 0
    %p42 = por %p40, %p41
    %p43 = scmp.ne.s32.totalorder %s29, %s30
    %p44 = scmp.eq.s32.totalorder %s22, 1
    %p45 = por %p43, %p44
    %p47 = scmp.ne.s32.totalorder %s30, %s46
    %p48 = scmp.eq.s32.totalorder %s22, 0
    %p49 = por %p47, %p48
    %s50 = ssub.s32 %s16, %s23
    %p51 = scmp.eq.s32.totalorder %s50, 0
    %s53 = sadd.s32 %s52, 1
    %s54 = scalar_select %p51, %s52, %s53
    %p57 = pneg %p51
    %p58 = scmp.eq.s32.totalorder %s16, 1
    %p59 = por %p57, %p58
    %p60 = scmp.ne.s32.totalorder %s52, %s55
    %p61 = scmp.eq.s32.totalorder %s16, 0
    %p62 = por %p60, %p61
    %p63 = scmp.ne.s32.totalorder %s52, %s55
    %p64 = scmp.eq.s32.totalorder %s21, 1
    %p65 = por %p63, %p64
    %p66 = scmp.ne.s32.totalorder %s55, %s56
    %p67 = scmp.eq.s32.totalorder %s21, 0
    %p68 = por %p66, %p67
    %p69 = scmp.ne.s32.totalorder %s55, %s56
    %p70 = scmp.eq.s32.totalorder %s22, 1
    %p71 = por %p69, %p70
    %p73 = scmp.ne.s32.totalorder %s56, %s72
    %p74 = scmp.eq.s32.totalorder %s22, 0
    %p75 = por %p73, %p74
    %s77 = sadd.s32 %s76, 1
    %p80 = scmp.eq.s32.totalorder %s16, 1
    %p81 = scmp.ne.s32.totalorder %s76, %s78
    %p82 = scmp.eq.s32.totalorder %s16, 0
    %p83 = por %p81, %p82
    %p84 = scmp.ne.s32.totalorder %s76, %s78
    %p85 = scmp.eq.s32.totalorder %s21, 1
    %p86 = por %p84, %p85
    %p87 = scmp.ne.s32.totalorder %s78, %s79
    %p88 = scmp.eq.s32.totalorder %s21, 0
    %p89 = por %p87, %p88
    %p90 = scmp.ne.s32.totalorder %s78, %s79
    %p91 = scmp.eq.s32.totalorder %s22, 1
    %p92 = por %p90, %p91
    %p94 = scmp.ne.s32.totalorder %s79, %s93
    %p95 = scmp.eq.s32.totalorder %s22, 0
    %p96 = por %p94, %p95
    %s98 = sadd.s32 %s97, 1
    %p101 = scmp.eq.s32.totalorder %s16, 1
    %p102 = scmp.ne.s32.totalorder %s97, %s99
    %p103 = scmp.eq.s32.totalorder %s16, 0
    %p104 = por %p102, %p103
    %p105 = scmp.ne.s32.totalorder %s97, %s99
    %p106 = scmp.eq.s32.totalorder %s21, 1
    %p107 = por %p105, %p106
    %p108 = scmp.ne.s32.totalorder %s99, %s100
    %p109 = scmp.eq.s32.totalorder %s21, 0
    %p110 = por %p108, %p109
    %p111 = scmp.ne.s32.totalorder %s99, %s100
    %p112 = scmp.eq.s32.totalorder %s22, 1
    %p113 = por %p111, %p112
    %p115 = scmp.ne.s32.totalorder %s100, %s114
    %p116 = scmp.eq.s32.totalorder %s22, 0
    %p117 = por %p115, %p116
    %s119 = sadd.s32 %s118, 1
    %p122 = scmp.eq.s32.totalorder %s16, 1
    %p123 = scmp.ne.s32.totalorder %s118, %s120
    %p124 = scmp.eq.s32.totalorder %s16, 0
    %p125 = por %p123, %p124
    %p126 = scmp.ne.s32.totalorder %s118, %s120
    %p127 = scmp.eq.s32.totalorder %s21, 1
    %p128 = por %p126, %p127
    %p129 = scmp.ne.s32.totalorder %s120, %s121
    %p130 = scmp.eq.s32.totalorder %s21, 0
    %p131 = por %p129, %p130
    %p132 = scmp.ne.s32.totalorder %s120, %s121
    %p133 = scmp.eq.s32.totalorder %s22, 1
    %p134 = por %p132, %p133
    %p136 = scmp.ne.s32.totalorder %s121, %s135
    %p137 = scmp.eq.s32.totalorder %s22, 0
    %p138 = por %p136, %p137
    %s140 = sadd.s32 %s139, 1
    %p143 = scmp.eq.s32.totalorder %s16, 1
    %p144 = scmp.ne.s32.totalorder %s139, %s141
    %p145 = scmp.eq.s32.totalorder %s16, 0
    %p146 = por %p144, %p145
    %p147 = scmp.ne.s32.totalorder %s139, %s141
    %p148 = scmp.eq.s32.totalorder %s21, 1
    %p149 = por %p147, %p148
    %p150 = scmp.ne.s32.totalorder %s141, %s142
    %p151 = scmp.eq.s32.totalorder %s21, 0
    %p152 = por %p150, %p151
    %p153 = scmp.ne.s32.totalorder %s141, %s142
    %p154 = scmp.eq.s32.totalorder %s22, 1
    %p155 = por %p153, %p154
    %p157 = scmp.ne.s32.totalorder %s142, %s156
    %p158 = scmp.eq.s32.totalorder %s22, 0
    %p159 = por %p157, %p158
    %s161 = sadd.s32 %s160, 1
    %p164 = scmp.eq.s32.totalorder %s16, 1
    %p165 = scmp.ne.s32.totalorder %s160, %s162
    %p166 = scmp.eq.s32.totalorder %s16, 0
    %p167 = por %p165, %p166
    %p168 = scmp.ne.s32.totalorder %s160, %s162
    %p169 = scmp.eq.s32.totalorder %s21, 1
    %p170 = por %p168, %p169
    %p171 = scmp.ne.s32.totalorder %s162, %s163
    %p172 = scmp.eq.s32.totalorder %s21, 0
    %p173 = por %p171, %p172
    %p174 = scmp.ne.s32.totalorder %s162, %s163
    %p175 = scmp.eq.s32.totalorder %s22, 1
    %p176 = por %p174, %p175
    %p178 = scmp.ne.s32.totalorder %s163, %s177
    %p179 = scmp.eq.s32.totalorder %s22, 0
    %p180 = por %p178, %p179
    %s182 = sadd.s32 %s181, 1
    %p185 = scmp.eq.s32.totalorder %s16, 1
    %p186 = scmp.ne.s32.totalorder %s181, %s183
    %p187 = scmp.eq.s32.totalorder %s16, 0
    %p188 = por %p186, %p187
    %p189 = scmp.ne.s32.totalorder %s181, %s183
    %p190 = scmp.eq.s32.totalorder %s21, 1
    %p191 = por %p189, %p190
    %p192 = scmp.ne.s32.totalorder %s183, %s184
    %p193 = scmp.eq.s32.totalorder %s21, 0
    %p194 = por %p192, %p193
    %p195 = scmp.ne.s32.totalorder %s183, %s184
    %p196 = scmp.eq.s32.totalorder %s22, 1
    %p197 = por %p195, %p196
    %p199 = scmp.ne.s32.totalorder %s184, %s198
    %p200 = scmp.eq.s32.totalorder %s22, 0
    %p201 = por %p199, %p200
    %s202 = ssub.s32 %s16, %s23
    %p203 = scmp.eq.s32.totalorder %s202, 0
    %s205 = sadd.s32 %s204, 1
    %s206 = scalar_select %p203, %s204, %s205
    %p209 = pneg %p203
    %p210 = scmp.eq.s32.totalorder %s16, 1
    %p211 = por %p209, %p210
    %p212 = scmp.ne.s32.totalorder %s204, %s207
    %p213 = scmp.eq.s32.totalorder %s16, 0
    %p214 = por %p212, %p213
    %p215 = scmp.ne.s32.totalorder %s204, %s207
    %p216 = scmp.eq.s32.totalorder %s21, 1
    %p217 = por %p215, %p216
    %p218 = scmp.ne.s32.totalorder %s207, %s208
    %p219 = scmp.eq.s32.totalorder %s21, 0
    %p220 = por %p218, %p219
    %p221 = scmp.ne.s32.totalorder %s207, %s208
    %p222 = scmp.eq.s32.totalorder %s22, 1
    %p223 = por %p221, %p222
    %p225 = scmp.ne.s32.totalorder %s208, %s224
    %p226 = scmp.eq.s32.totalorder %s22, 0
    %p227 = por %p225, %p226
    %p228 = scmp.le.s32.totalorder 1, %s16
    %p229 = scmp.lt.s32.totalorder %s16, 3
    %p230 = pnand %p228, %p229
    %p231 = pneg %p230
    // Predicated region
    $region9: #{tpu_custom_call.1} parent=5 // pred_check
      _
    $region10: #{tpu_custom_call.1} parent=5 // pred_check_branch
      %233 = sbr.rel (%p230) target = $region12
    $region11: #{tpu_custom_call.1} parent=5 // pred_region
      %s234 = ssub.s32 %s16, 1
      // Predicated region
      $region13: #{tpu_custom_call.1} parent=11 // pred_check
        %p235 = pneg %p89
      $region14: #{tpu_custom_call.1} parent=11 // pred_check_branch
        %237 = sbr.rel (%p235) target = $region16
      $region15: #{tpu_custom_call.1} parent=11 // pred_region
        _
      $region16: #{tpu_custom_call.1} parent=11 // pred_fallthru
        _
      // Predicated region
      $region17: #{tpu_custom_call.1} parent=11 // pred_check
        %p238 = pneg %p110
      $region18: #{tpu_custom_call.1} parent=11 // pred_check_branch
        %240 = sbr.rel (%p238) target = $region20
      $region19: #{tpu_custom_call.1} parent=11 // pred_region
        _
      $region20: #{tpu_custom_call.1} parent=11 // pred_fallthru
        _
      // Predicated region
      $region21: #{tpu_custom_call.1} parent=11 // pred_check
        %p241 = pneg %p131
      $region22: #{tpu_custom_call.1} parent=11 // pred_check_branch
        %243 = sbr.rel (%p241) target = $region24
      $region23: #{tpu_custom_call.1} parent=11 // pred_region
        _
      $region24: #{tpu_custom_call.1} parent=11 // pred_fallthru
        _
      // Predicated region
      $region25: #{tpu_custom_call.1} parent=11 // pred_check
        %p244 = pneg %p152
      $region26: #{tpu_custom_call.1} parent=11 // pred_check_branch
        %246 = sbr.rel (%p244) target = $region28
      $region27: #{tpu_custom_call.1} parent=11 // pred_region
        _
      $region28: #{tpu_custom_call.1} parent=11 // pred_fallthru
        _
      // Predicated region
      $region29: #{tpu_custom_call.1} parent=11 // pred_check
        %p247 = pneg %p173
      $region30: #{tpu_custom_call.1} parent=11 // pred_check_branch
        %249 = sbr.rel (%p247) target = $region32
      $region31: #{tpu_custom_call.1} parent=11 // pred_region
        _
      $region32: #{tpu_custom_call.1} parent=11 // pred_fallthru
        _
      // Predicated region
      $region33: #{tpu_custom_call.1} parent=11 // pred_check
        %p250 = pneg %p194
      $region34: #{tpu_custom_call.1} parent=11 // pred_check_branch
        %252 = sbr.rel (%p250) target = $region36
      $region35: #{tpu_custom_call.1} parent=11 // pred_region
        _
      $region36: #{tpu_custom_call.1} parent=11 // pred_fallthru
        _
    $region12: #{tpu_custom_call.1} parent=5 // pred_fallthru
      _
    %p253 = scmp.lt.s32.totalorder %s16, 2
    // Predicated region
    $region37: #{tpu_custom_call.1} parent=5 // pred_check
      %p254 = pneg %p253
    $region38: #{tpu_custom_call.1} parent=5 // pred_check_branch
      %256 = sbr.rel (%p254) target = $region40
    $region39: #{tpu_custom_call.1} parent=5 // pred_region
      // Predicated region
      $region41: #{tpu_custom_call.1} parent=39 // pred_check
        %p257 = pneg %p36
      $region42: #{tpu_custom_call.1} parent=39 // pred_check_branch
        %259 = sbr.rel (%p257) target = $region44
      $region43: #{tpu_custom_call.1} parent=39 // pred_region
        %s260 = smul.u32 16, %s16
        %p261 = scmp.lt.s32.totalorder %s260, 31
        %s262 = scalar_select %p261, %s260, 31
        %s263 = smul.addr %s262, 8
        %s264 = scalar_lea.vmem %s0, %s263
        %s265 = smul.u32 16, %s16
      $region44: #{tpu_custom_call.1} parent=39 // pred_fallthru
        _
      // Predicated region
      $region45: #{tpu_custom_call.1} parent=39 // pred_check
        %p266 = pneg %p62
      $region46: #{tpu_custom_call.1} parent=39 // pred_check_branch
        %268 = sbr.rel (%p266) target = $region48
      $region47: #{tpu_custom_call.1} parent=39 // pred_region
        %s269 = smul.u32 16, %s16
        %p270 = scmp.lt.s32.totalorder %s269, 31
        %s271 = scalar_select %p270, %s269, 31
        %s272 = smul.addr %s271, 8
        %s273 = scalar_lea.vmem %s1, %s272
        %s274 = smul.u32 16, %s16
      $region48: #{tpu_custom_call.1} parent=39 // pred_fallthru
        _
    $region40: #{tpu_custom_call.1} parent=5 // pred_fallthru
      _
    %p275 = scmp.le.s32.totalorder 1, %s16
    %p276 = scmp.lt.s32.totalorder %s16, 3
    %p277 = pnand %p275, %p276
    %p278 = pneg %p277
    // Predicated region
    $region49: #{tpu_custom_call.1} parent=5 // pred_check
      _
    $region50: #{tpu_custom_call.1} parent=5 // pred_check_branch
      %280 = sbr.rel (%p277) target = $region52
    $region51: #{tpu_custom_call.1} parent=5 // pred_region
      %s281 = ssub.s32 %s16, 1
      %s282 = smul.u32 16, %s21
      %p283 = scmp.lt.s32.totalorder %s282, 31
      %s284 = scalar_select %p283, %s282, 31
      %s285 = smul.addr %s284, 8
      %s286 = scalar_lea.vmem %s0, %s285
      %p287 = pneg %p42
      %p288 = pneg %p39
      %s289 = smul.u32 16, %s21
      %p290 = scmp.lt.s32.totalorder %s289, 31
      %s291 = scalar_select %p290, %s289, 31
      %s292 = smul.addr %s291, 8
      %s293 = scalar_lea.vmem %s1, %s292
      %p294 = pneg %p68
      %p295 = pneg %p65
      %p296 = pneg %p89
      %p297 = pneg %p86
      %p298 = pneg %p110
      %p299 = pneg %p107
      %p300 = pneg %p131
      %p301 = pneg %p128
      %p302 = pneg %p152
      %p303 = pneg %p149
      %p304 = pneg %p173
      %p305 = pneg %p170
      %p306 = pneg %p194
      %p307 = pneg %p191
      %p308 = pneg %p220
      %p309 = pneg %p217
      %s310 = smul.u32 16, %s21
      %p311 = scmp.lt.s32.totalorder %s310, 31
      %s312 = scalar_select %p311, %s310, 31
      %s313 = smul.addr %s312, 8
      %s314 = scalar_lea.vmem %s8, %s313
      %s315 = smul.u32 16, %s21
      %p316 = scmp.lt.s32.totalorder %s315, 31
      %s317 = scalar_select %p316, %s315, 31
      %s318 = smul.addr %s317, 8
      %s319 = scalar_lea.vmem %s0, %s318
      %s320 = smul.u32 16, %s21
      %s321 = smul.u32 16, %s21
      %p322 = scmp.lt.s32.totalorder %s321, 31
      %s323 = scalar_select %p322, %s321, 31
      %s324 = smul.addr %s323, 8
      %s325 = scalar_lea.vmem %s1, %s324
      %s326 = smul.u32 16, %s21
      %s327 = smul.u32 16, %s21
      %p328 = scmp.lt.s32.totalorder %s327, 31
      %s329 = scalar_select %p328, %s327, 31
      %s330 = smul.addr %s329, 8
      %s331 = scalar_lea.vmem %s8, %s330
      %s332 = smul.u32 16, %s21
      %v333 = vld [vmem:[%s2] sm:$0xff]
      %v334 = vld [vmem:[%s2 + $0x8] sm:$0xff]
      %v335 = vld [vmem:[%s2 + $0x10] sm:$0xff]
      %v336 = vld [vmem:[%s2 + $0x18] sm:$0xff]
      %v337 = vld [vmem:[%s3] sm:$0x1]
      %v338 = vld [vmem:[%s4] sm:$0xff]
      %v339 = vld [vmem:[%s4 + $0x8] sm:$0xff]
      %v340 = vld [vmem:[%s4 + $0x10] sm:$0xff]
      %v341 = vld [vmem:[%s4 + $0x18] sm:$0xff]
      %v342 = vld [vmem:[%s4 + $0x20] sm:$0xff]
      %v343 = vld [vmem:[%s4 + $0x28] sm:$0xff]
      %v344 = vld [vmem:[%s4 + $0x30] sm:$0xff]
      %v345 = vld [vmem:[%s4 + $0x38] sm:$0xff]
      %v346 = vld [vmem:[%s4 + $0x40] sm:$0xff]
      %v347 = vld [vmem:[%s4 + $0x48] sm:$0xff]
      %v348 = vld [vmem:[%s4 + $0x50] sm:$0xff]
      %v349 = vld [vmem:[%s4 + $0x58] sm:$0xff]
      %v350 = vld [vmem:[%s4 + $0x60] sm:$0xff]
      %v351 = vld [vmem:[%s4 + $0x68] sm:$0xff]
      %v352 = vld [vmem:[%s4 + $0x70] sm:$0xff]
      %v353 = vld [vmem:[%s4 + $0x78] sm:$0xff]
      %v354 = vld [vmem:[%s5] sm:$0x1]
      %v355 = vld [vmem:[%s6] sm:$0x1]
      %v356 = vld [vmem:[#allocation2] sm:$0x1]
      %v357 = vld [vmem:[%s319] sm:$0xff]
      %v358 = vld [vmem:[%s319 + $0x8] sm:$0xff]
      %v359 = vld [vmem:[%s319 + $0x10] sm:$0xff]
      %v360 = vld [vmem:[%s319 + $0x18] sm:$0xff]
      %v361 = vld [vmem:[%s319 + $0x20] sm:$0xff]
      %v362 = vld [vmem:[%s319 + $0x28] sm:$0xff]
      %v363 = vld [vmem:[%s319 + $0x30] sm:$0xff]
      %v364 = vld [vmem:[%s319 + $0x38] sm:$0xff]
      %v365 = vld [vmem:[%s319 + $0x40] sm:$0xff]
      %v366 = vld [vmem:[%s319 + $0x48] sm:$0xff]
      %v367 = vld [vmem:[%s319 + $0x50] sm:$0xff]
      %v368 = vld [vmem:[%s319 + $0x58] sm:$0xff]
      %v369 = vld [vmem:[%s319 + $0x60] sm:$0xff]
      %v370 = vld [vmem:[%s319 + $0x68] sm:$0xff]
      %v371 = vld [vmem:[%s319 + $0x70] sm:$0xff]
      %v372 = vld [vmem:[%s319 + $0x78] sm:$0xff]
      %v373 = vld [vmem:[%s325] sm:$0xff]
      %v374 = vld [vmem:[%s325 + $0x8] sm:$0xff]
      %v375 = vld [vmem:[%s325 + $0x10] sm:$0xff]
      %v376 = vld [vmem:[%s325 + $0x18] sm:$0xff]
      %v377 = vld [vmem:[%s325 + $0x20] sm:$0xff]
      %v378 = vld [vmem:[%s325 + $0x28] sm:$0xff]
      %v379 = vld [vmem:[%s325 + $0x30] sm:$0xff]
      %v380 = vld [vmem:[%s325 + $0x38] sm:$0xff]
      %v381 = vld [vmem:[%s325 + $0x40] sm:$0xff]
      %v382 = vld [vmem:[%s325 + $0x48] sm:$0xff]
      %v383 = vld [vmem:[%s325 + $0x50] sm:$0xff]
      %v384 = vld [vmem:[%s325 + $0x58] sm:$0xff]
      %v385 = vld [vmem:[%s325 + $0x60] sm:$0xff]
      %v386 = vld [vmem:[%s325 + $0x68] sm:$0xff]
      %v387 = vld [vmem:[%s325 + $0x70] sm:$0xff]
      %v388 = vld [vmem:[%s325 + $0x78] sm:$0xff]
      %v390 = vlaneseq
      %v391 = vshrl.u32 %v390, 7
      %v392 = vsub.s32 0, %v391
      %v393 = vrot.slane %v337, %v392
      %vm395 = vcmask 261120
      %v397 = vsel %vm395, %v357, 0
      %v400 = vsel %vm395, %v358, 0
      %v403 = vsel %vm395, %v359, 0
      %v406 = vsel %vm395, %v360, 0
      %v409 = vsel %vm395, %v361, 0
      %v412 = vsel %vm395, %v362, 0
      %v415 = vsel %vm395, %v363, 0
      %v418 = vsel %vm395, %v364, 0
      %v421 = vsel %vm395, %v365, 0
      %v424 = vsel %vm395, %v366, 0
      %v427 = vsel %vm395, %v367, 0
      %v430 = vsel %vm395, %v368, 0
      %v433 = vsel %vm395, %v369, 0
      %v436 = vsel %vm395, %v370, 0
      %v439 = vsel %vm395, %v371, 0
      %v442 = vsel %vm395, %v372, 0
      %v445 = vsel %vm395, %v373, 0
      %v448 = vsel %vm395, %v374, 0
      %v451 = vsel %vm395, %v375, 0
      %v454 = vsel %vm395, %v376, 0
      %v457 = vsel %vm395, %v377, 0
      %v460 = vsel %vm395, %v378, 0
      %v463 = vsel %vm395, %v379, 0
      %v466 = vsel %vm395, %v380, 0
      %v469 = vsel %vm395, %v381, 0
      %v472 = vsel %vm395, %v382, 0
      %v475 = vsel %vm395, %v383, 0
      %v478 = vsel %vm395, %v384, 0
      %v481 = vsel %vm395, %v385, 0
      %v484 = vsel %vm395, %v386, 0
      %v487 = vsel %vm395, %v387, 0
      %v490 = vsel %vm395, %v388, 0
      %492 = vmatprep.subr.mxu0 0.0
      %493 = vmatpush1.msra.mxu0 %v333
      %494 = vmatprep.subr.mxu0 0.0
      %495 = vmatpush1.msra.mxu0 %v334
      %496 = vmatprep.subr.mxu0 0.0
      %497 = vmatpush1.msra.mxu0 %v335
      %498 = vmatprep.subr.mxu0 0.0
      %499 = vmatpush1.msra.mxu0 %v336
      %500 = vmatprep.subr.mxu0 0.0
      %501 = vmatpush1.msra.mxu0 0.0
      %502 = vmatprep.subr.mxu0 0.0
      %503 = vmatpush1.msra.mxu0 0.0
      %504 = vmatprep.subr.mxu0 0.0
      %505 = vmatpush1.msra.mxu0 0.0
      %506 = vmatprep.subr.mxu0 0.0
      %507 = vmatpush1.msra.mxu0 0.0
      %508 = vmatprep.subr.mxu0 0.0
      %509 = vmatpush1.msra.mxu0 0.0
      %510 = vmatprep.subr.mxu0 0.0
      %511 = vmatpush1.msra.mxu0 0.0
      %512 = vmatprep.subr.mxu0 0.0
      %513 = vmatpush1.msra.mxu0 0.0
      %514 = vmatprep.subr.mxu0 0.0
      %515 = vmatpush1.msra.mxu0 0.0
      %516 = vmatprep.subr.mxu0 0.0
      %517 = vmatpush1.msra.mxu0 0.0
      %518 = vmatprep.subr.mxu0 0.0
      %519 = vmatpush1.msra.mxu0 0.0
      %520 = vmatprep.subr.mxu0 0.0
      %521 = vmatpush1.msra.mxu0 0.0
      %522 = vmatprep.subr.mxu0 0.0
      %523 = vmatpush1.msra.mxu0 0.0
      %524 = vmatprep.subr.mxu0 0.0
      %525 = vmatpush1.msra.mxu0 0.0
      %526 = vmatprep.subr.mxu0 0.0
      %527 = vmatpush1.msra.mxu0 0.0
      %528 = vmatprep.subr.mxu0 0.0
      %529 = vmatpush1.msra.mxu0 0.0
      %530 = vmatprep.subr.mxu0 0.0
      %531 = vmatpush1.msra.mxu0 0.0
      %532 = vmatprep.subr.mxu0 0.0
      %533 = vmatpush1.msra.mxu0 0.0
      %534 = vmatprep.subr.mxu0 0.0
      %535 = vmatpush1.msra.mxu0 0.0
      %536 = vmatprep.subr.mxu0 0.0
      %537 = vmatpush1.msra.mxu0 0.0
      %538 = vmatprep.subr.mxu0 0.0
      %539 = vmatpush1.msra.mxu0 0.0
      %540 = vmatprep.subr.mxu0 0.0
      %541 = vmatpush1.msra.mxu0 0.0
      %542 = vmatprep.subr.mxu0 0.0
      %543 = vmatpush1.msra.mxu0 0.0
      %544 = vmatprep.subr.mxu0 0.0
      %545 = vmatpush1.msra.mxu0 0.0
      %546 = vmatprep.subr.mxu0 0.0
      %547 = vmatpush1.msra.mxu0 0.0
      %548 = vmatprep.subr.mxu0 0.0
      %549 = vmatpush1.msra.mxu0 0.0
      %550 = vmatprep.subr.mxu0 0.0
      %551 = vmatpush1.msra.mxu0 0.0
      %552 = vmatprep.subr.mxu0 0.0
      %553 = vmatpush1.msra.mxu0 0.0
      %554 = vmatprep.subr.mxu0 0.0
      %555 = vmatpush1.msra.mxu0 0.0
      %556 = vmatprep.mubr.f32.mxu0 0.0
      %557 = vmatmul.mubr.f32.gmra.mrb[0].mxu0 %v397
      %v558 = vpop.f32.mrb[0].mxu0
      %v559 = vadd.f32 %v393, %v558
      %v560 = vpop.f32.mrb[0].mxu0
      %561 = vmatprep.mubr.f32.mxu0 0.0
      %562 = vmatmul.mubr.f32.gmra.mrb[0].mxu0 %v400
      %v563 = vpop.f32.mrb[0].mxu0
      %v564 = vadd.f32 %v393, %v563
      %v565 = vpop.f32.mrb[0].mxu0
      %566 = vmatprep.mubr.f32.mxu0 0.0
      %567 = vmatmul.mubr.f32.gmra.mrb[0].mxu0 %v403
      %v568 = vpop.f32.mrb[0].mxu0
      %v569 = vadd.f32 %v393, %v568
      %v570 = vpop.f32.mrb[0].mxu0
      %571 = vmatprep.mubr.f32.mxu0 0.0
      %572 = vmatmul.mubr.f32.gmra.mrb[0].mxu0 %v406
      %v573 = vpop.f32.mrb[0].mxu0
      %v574 = vadd.f32 %v393, %v573
      %v575 = vpop.f32.mrb[0].mxu0
      %576 = vmatprep.mubr.f32.mxu0 0.0
      %577 = vmatmul.mubr.f32.gmra.mrb[0].mxu0 %v409
      %v578 = vpop.f32.mrb[0].mxu0
      %v579 = vadd.f32 %v393, %v578
      %v580 = vpop.f32.mrb[0].mxu0
      %581 = vmatprep.mubr.f32.mxu0 0.0
      %582 = vmatmul.mubr.f32.gmra.mrb[0].mxu0 %v412
      %v583 = vpop.f32.mrb[0].mxu0
      %v584 = vadd.f32 %v393, %v583
      %v585 = vpop.f32.mrb[0].mxu0
      %586 = vmatprep.mubr.f32.mxu0 0.0
      %587 = vmatmul.mubr.f32.gmra.mrb[0].mxu0 %v415
      %v588 = vpop.f32.mrb[0].mxu0
      %v589 = vadd.f32 %v393, %v588
      %v590 = vpop.f32.mrb[0].mxu0
      %591 = vmatprep.mubr.f32.mxu0 0.0
      %592 = vmatmul.mubr.f32.gmra.mrb[0].mxu0 %v418
      %v593 = vpop.f32.mrb[0].mxu0
      %v594 = vadd.f32 %v393, %v593
      %v595 = vpop.f32.mrb[0].mxu0
      %596 = vmatprep.mubr.f32.mxu0 0.0
      %597 = vmatmul.mubr.f32.gmra.mrb[0].mxu0 %v421
      %v598 = vpop.f32.mrb[0].mxu0
      %v599 = vadd.f32 %v393, %v598
      %v600 = vpop.f32.mrb[0].mxu0
      %601 = vmatprep.mubr.f32.mxu0 0.0
      %602 = vmatmul.mubr.f32.gmra.mrb[0].mxu0 %v424
      %v603 = vpop.f32.mrb[0].mxu0
      %v604 = vadd.f32 %v393, %v603
      %v605 = vpop.f32.mrb[0].mxu0
      %606 = vmatprep.mubr.f32.mxu0 0.0
      %607 = vmatmul.mubr.f32.gmra.mrb[0].mxu0 %v427
      %v608 = vpop.f32.mrb[0].mxu0
      %v609 = vadd.f32 %v393, %v608
      %v610 = vpop.f32.mrb[0].mxu0
      %611 = vmatprep.mubr.f32.mxu0 0.0
      %612 = vmatmul.mubr.f32.gmra.mrb[0].mxu0 %v430
      %v613 = vpop.f32.mrb[0].mxu0
      %v614 = vadd.f32 %v393, %v613
      %v615 = vpop.f32.mrb[0].mxu0
      %616 = vmatprep.mubr.f32.mxu0 0.0
      %617 = vmatmul.mubr.f32.gmra.mrb[0].mxu0 %v433
      %v618 = vpop.f32.mrb[0].mxu0
      %v619 = vadd.f32 %v393, %v618
      %v620 = vpop.f32.mrb[0].mxu0
      %621 = vmatprep.mubr.f32.mxu0 0.0
      %622 = vmatmul.mubr.f32.gmra.mrb[0].mxu0 %v436
      %v623 = vpop.f32.mrb[0].mxu0
      %v624 = vadd.f32 %v393, %v623
      %v625 = vpop.f32.mrb[0].mxu0
      %626 = vmatprep.mubr.f32.mxu0 0.0
      %627 = vmatmul.mubr.f32.gmra.mrb[0].mxu0 %v439
      %v628 = vpop.f32.mrb[0].mxu0
      %v629 = vadd.f32 %v393, %v628
      %v630 = vpop.f32.mrb[0].mxu0
      %631 = vmatprep.mubr.f32.mxu0 0.0
      %632 = vmatmul.mubr.f32.gmra.mrb[0].mxu0 %v442
      %v633 = vpop.f32.mrb[0].mxu0
      %v634 = vadd.f32 %v393, %v633
      %v635 = vpop.f32.mrb[0].mxu0
      %636 = vmatprep.mubr.f32.mxu0 0.0
      %637 = vmatmul.mubr.f32.gmra.mrb[0].mxu0 %v445
      %v638 = vpop.f32.mrb[0].mxu0
      %v639 = vadd.f32 %v393, %v638
      %v640 = vpop.f32.mrb[0].mxu0
      %641 = vmatprep.mubr.f32.mxu0 0.0
      %642 = vmatmul.mubr.f32.gmra.mrb[0].mxu0 %v448
      %v643 = vpop.f32.mrb[0].mxu0
      %v644 = vadd.f32 %v393, %v643
      %v645 = vpop.f32.mrb[0].mxu0
      %646 = vmatprep.mubr.f32.mxu0 0.0
      %647 = vmatmul.mubr.f32.gmra.mrb[0].mxu0 %v451
      %v648 = vpop.f32.mrb[0].mxu0
      %v649 = vadd.f32 %v393, %v648
      %v650 = vpop.f32.mrb[0].mxu0
      %651 = vmatprep.mubr.f32.mxu0 0.0
      %652 = vmatmul.mubr.f32.gmra.mrb[0].mxu0 %v454
      %v653 = vpop.f32.mrb[0].mxu0
      %v654 = vadd.f32 %v393, %v653
      %v655 = vpop.f32.mrb[0].mxu0
      %656 = vmatprep.mubr.f32.mxu0 0.0
      %657 = vmatmul.mubr.f32.gmra.mrb[0].mxu0 %v457
      %v658 = vpop.f32.mrb[0].mxu0
      %v659 = vadd.f32 %v393, %v658
      %v660 = vpop.f32.mrb[0].mxu0
      %661 = vmatprep.mubr.f32.mxu0 0.0
      %662 = vmatmul.mubr.f32.gmra.mrb[0].mxu0 %v460
      %v663 = vpop.f32.mrb[0].mxu0
      %v664 = vadd.f32 %v393, %v663
      %v665 = vpop.f32.mrb[0].mxu0
      %666 = vmatprep.mubr.f32.mxu0 0.0
      %667 = vmatmul.mubr.f32.gmra.mrb[0].mxu0 %v463
      %v668 = vpop.f32.mrb[0].mxu0
      %v669 = vadd.f32 %v393, %v668
      %v670 = vpop.f32.mrb[0].mxu0
      %671 = vmatprep.mubr.f32.mxu0 0.0
      %672 = vmatmul.mubr.f32.gmra.mrb[0].mxu0 %v466
      %v673 = vpop.f32.mrb[0].mxu0
      %v674 = vadd.f32 %v393, %v673
      %v675 = vpop.f32.mrb[0].mxu0
      %676 = vmatprep.mubr.f32.mxu0 0.0
      %677 = vmatmul.mubr.f32.gmra.mrb[0].mxu0 %v469
      %v678 = vpop.f32.mrb[0].mxu0
      %v679 = vadd.f32 %v393, %v678
      %v680 = vpop.f32.mrb[0].mxu0
      %681 = vmatprep.mubr.f32.mxu0 0.0
      %682 = vmatmul.mubr.f32.gmra.mrb[0].mxu0 %v472
      %v683 = vpop.f32.mrb[0].mxu0
      %v684 = vadd.f32 %v393, %v683
      %v685 = vpop.f32.mrb[0].mxu0
      %686 = vmatprep.mubr.f32.mxu0 0.0
      %687 = vmatmul.mubr.f32.gmra.mrb[0].mxu0 %v475
      %v688 = vpop.f32.mrb[0].mxu0
      %v689 = vadd.f32 %v393, %v688
      %v690 = vpop.f32.mrb[0].mxu0
      %691 = vmatprep.mubr.f32.mxu0 0.0
      %692 = vmatmul.mubr.f32.gmra.mrb[0].mxu0 %v478
      %v693 = vpop.f32.mrb[0].mxu0
      %v694 = vadd.f32 %v393, %v693
      %v695 = vpop.f32.mrb[0].mxu0
      %696 = vmatprep.mubr.f32.mxu0 0.0
      %697 = vmatmul.mubr.f32.gmra.mrb[0].mxu0 %v481
      %v698 = vpop.f32.mrb[0].mxu0
      %v699 = vadd.f32 %v393, %v698
      %v700 = vpop.f32.mrb[0].mxu0
      %701 = vmatprep.mubr.f32.mxu0 0.0
      %702 = vmatmul.mubr.f32.gmra.mrb[0].mxu0 %v484
      %v703 = vpop.f32.mrb[0].mxu0
      %v704 = vadd.f32 %v393, %v703
      %v705 = vpop.f32.mrb[0].mxu0
      %706 = vmatprep.mubr.f32.mxu0 0.0
      %707 = vmatmul.mubr.f32.gmra.mrb[0].mxu0 %v487
      %v708 = vpop.f32.mrb[0].mxu0
      %v709 = vadd.f32 %v393, %v708
      %v710 = vpop.f32.mrb[0].mxu0
      %711 = vmatprep.mubr.f32.mxu0 0.0
      %712 = vmatmul.mubr.f32.gmra.mrb[0].mxu0 %v490
      %v713 = vpop.f32.mrb[0].mxu0
      %v714 = vadd.f32 %v393, %v713
      %v715 = vpop.f32.mrb[0].mxu0
      %716 = vdwg.mxu0
      %v717 = vmax.f32 %v559, 0.0
      %v718 = vmax.f32 %v564, 0.0
      %v719 = vmax.f32 %v569, 0.0
      %v720 = vmax.f32 %v574, 0.0
      %v721 = vmax.f32 %v579, 0.0
      %v722 = vmax.f32 %v584, 0.0
      %v723 = vmax.f32 %v589, 0.0
      %v724 = vmax.f32 %v594, 0.0
      %v725 = vmax.f32 %v599, 0.0
      %v726 = vmax.f32 %v604, 0.0
      %v727 = vmax.f32 %v609, 0.0
      %v728 = vmax.f32 %v614, 0.0
      %v729 = vmax.f32 %v619, 0.0
      %v730 = vmax.f32 %v624, 0.0
      %v731 = vmax.f32 %v629, 0.0
      %v732 = vmax.f32 %v634, 0.0
      %v733 = vmax.f32 %v639, 0.0
      %v734 = vmax.f32 %v644, 0.0
      %v735 = vmax.f32 %v649, 0.0
      %v736 = vmax.f32 %v654, 0.0
      %v737 = vmax.f32 %v659, 0.0
      %v738 = vmax.f32 %v664, 0.0
      %v739 = vmax.f32 %v669, 0.0
      %v740 = vmax.f32 %v674, 0.0
      %v741 = vmax.f32 %v679, 0.0
      %v742 = vmax.f32 %v684, 0.0
      %v743 = vmax.f32 %v689, 0.0
      %v744 = vmax.f32 %v694, 0.0
      %v745 = vmax.f32 %v699, 0.0
      %v746 = vmax.f32 %v704, 0.0
      %v747 = vmax.f32 %v709, 0.0
      %v748 = vmax.f32 %v714, 0.0
      %v750 = vlaneseq
      %v751 = vshrl.u32 %v750, 7
      %v752 = vsub.s32 0, %v751
      %v753 = vrot.slane %v354, %v752
      %755 = vmatprep.subr.mxu0 0.0
      %756 = vmatpush1.msra.mxu0 %v338
      %757 = vmatprep.subr.mxu0 0.0
      %758 = vmatpush1.msra.mxu0 %v339
      %759 = vmatprep.subr.mxu0 0.0
      %760 = vmatpush1.msra.mxu0 %v340
      %761 = vmatprep.subr.mxu0 0.0
      %762 = vmatpush1.msra.mxu0 %v341
      %763 = vmatprep.subr.mxu0 0.0
      %764 = vmatpush1.msra.mxu0 %v342
      %765 = vmatprep.subr.mxu0 0.0
      %766 = vmatpush1.msra.mxu0 %v343
      %767 = vmatprep.subr.mxu0 0.0
      %768 = vmatpush1.msra.mxu0 %v344
      %769 = vmatprep.subr.mxu0 0.0
      %770 = vmatpush1.msra.mxu0 %v345
      %771 = vmatprep.subr.mxu0 0.0
      %772 = vmatpush1.msra.mxu0 %v346
      %773 = vmatprep.subr.mxu0 0.0
      %774 = vmatpush1.msra.mxu0 %v347
      %775 = vmatprep.subr.mxu0 0.0
      %776 = vmatpush1.msra.mxu0 %v348
      %777 = vmatprep.subr.mxu0 0.0
      %778 = vmatpush1.msra.mxu0 %v349
      %779 = vmatprep.subr.mxu0 0.0
      %780 = vmatpush1.msra.mxu0 %v350
      %781 = vmatprep.subr.mxu0 0.0
      %782 = vmatpush1.msra.mxu0 %v351
      %783 = vmatprep.subr.mxu0 0.0
      %784 = vmatpush1.msra.mxu0 %v352
      %785 = vmatprep.subr.mxu0 0.0
      %786 = vmatpush1.msra.mxu0 %v353
      %787 = vmatprep.subr.mxu0 0.0
      %788 = vmatpush1.msra.mxu0 0.0
      %789 = vmatprep.subr.mxu0 0.0
      %790 = vmatpush1.msra.mxu0 0.0
      %791 = vmatprep.subr.mxu0 0.0
      %792 = vmatpush1.msra.mxu0 0.0
      %793 = vmatprep.subr.mxu0 0.0
      %794 = vmatpush1.msra.mxu0 0.0
      %795 = vmatprep.subr.mxu0 0.0
      %796 = vmatpush1.msra.mxu0 0.0
      %797 = vmatprep.subr.mxu0 0.0
      %798 = vmatpush1.msra.mxu0 0.0
      %799 = vmatprep.subr.mxu0 0.0
      %800 = vmatpush1.msra.mxu0 0.0
      %801 = vmatprep.subr.mxu0 0.0
      %802 = vmatpush1.msra.mxu0 0.0
      %803 = vmatprep.subr.mxu0 0.0
      %804 = vmatpush1.msra.mxu0 0.0
      %805 = vmatprep.subr.mxu0 0.0
      %806 = vmatpush1.msra.mxu0 0.0
      %807 = vmatprep.subr.mxu0 0.0
      %808 = vmatpush1.msra.mxu0 0.0
      %809 = vmatprep.subr.mxu0 0.0
      %810 = vmatpush1.msra.mxu0 0.0
      %811 = vmatprep.subr.mxu0 0.0
      %812 = vmatpush1.msra.mxu0 0.0
      %813 = vmatprep.subr.mxu0 0.0
      %814 = vmatpush1.msra.mxu0 0.0
      %815 = vmatprep.subr.mxu0 0.0
      %816 = vmatpush1.msra.mxu0 0.0
      %817 = vmatprep.subr.mxu0 0.0
      %818 = vmatpush1.msra.mxu0 0.0
      %819 = vmatprep.mubr.f32.mxu0 0.0
      %820 = vmatmul.mubr.f32.gmra.mrb[0].mxu0 %v717
      %v821 = vpop.f32.mrb[0].mxu0
      %v822 = vadd.f32 %v753, %v821
      %v823 = vpop.f32.mrb[0].mxu0
      %824 = vmatprep.mubr.f32.mxu0 0.0
      %825 = vmatmul.mubr.f32.gmra.mrb[0].mxu0 %v718
      %v826 = vpop.f32.mrb[0].mxu0
      %v827 = vadd.f32 %v753, %v826
      %v828 = vpop.f32.mrb[0].mxu0
      %829 = vmatprep.mubr.f32.mxu0 0.0
      %830 = vmatmul.mubr.f32.gmra.mrb[0].mxu0 %v719
      %v831 = vpop.f32.mrb[0].mxu0
      %v832 = vadd.f32 %v753, %v831
      %v833 = vpop.f32.mrb[0].mxu0
      %834 = vmatprep.mubr.f32.mxu0 0.0
      %835 = vmatmul.mubr.f32.gmra.mrb[0].mxu0 %v720
      %v836 = vpop.f32.mrb[0].mxu0
      %v837 = vadd.f32 %v753, %v836
      %v838 = vpop.f32.mrb[0].mxu0
      %839 = vmatprep.mubr.f32.mxu0 0.0
      %840 = vmatmul.mubr.f32.gmra.mrb[0].mxu0 %v721
      %v841 = vpop.f32.mrb[0].mxu0
      %v842 = vadd.f32 %v753, %v841
      %v843 = vpop.f32.mrb[0].mxu0
      %844 = vmatprep.mubr.f32.mxu0 0.0
      %845 = vmatmul.mubr.f32.gmra.mrb[0].mxu0 %v722
      %v846 = vpop.f32.mrb[0].mxu0
      %v847 = vadd.f32 %v753, %v846
      %v848 = vpop.f32.mrb[0].mxu0
      %849 = vmatprep.mubr.f32.mxu0 0.0
      %850 = vmatmul.mubr.f32.gmra.mrb[0].mxu0 %v723
      %v851 = vpop.f32.mrb[0].mxu0
      %v852 = vadd.f32 %v753, %v851
      %v853 = vpop.f32.mrb[0].mxu0
      %854 = vmatprep.mubr.f32.mxu0 0.0
      %855 = vmatmul.mubr.f32.gmra.mrb[0].mxu0 %v724
      %v856 = vpop.f32.mrb[0].mxu0
      %v857 = vadd.f32 %v753, %v856
      %v858 = vpop.f32.mrb[0].mxu0
      %859 = vmatprep.mubr.f32.mxu0 0.0
      %860 = vmatmul.mubr.f32.gmra.mrb[0].mxu0 %v725
      %v861 = vpop.f32.mrb[0].mxu0
      %v862 = vadd.f32 %v753, %v861
      %v863 = vpop.f32.mrb[0].mxu0
      %864 = vmatprep.mubr.f32.mxu0 0.0
      %865 = vmatmul.mubr.f32.gmra.mrb[0].mxu0 %v726
      %v866 = vpop.f32.mrb[0].mxu0
      %v867 = vadd.f32 %v753, %v866
      %v868 = vpop.f32.mrb[0].mxu0
      %869 = vmatprep.mubr.f32.mxu0 0.0
      %870 = vmatmul.mubr.f32.gmra.mrb[0].mxu0 %v727
      %v871 = vpop.f32.mrb[0].mxu0
      %v872 = vadd.f32 %v753, %v871
      %v873 = vpop.f32.mrb[0].mxu0
      %874 = vmatprep.mubr.f32.mxu0 0.0
      %875 = vmatmul.mubr.f32.gmra.mrb[0].mxu0 %v728
      %v876 = vpop.f32.mrb[0].mxu0
      %v877 = vadd.f32 %v753, %v876
      %v878 = vpop.f32.mrb[0].mxu0
      %879 = vmatprep.mubr.f32.mxu0 0.0
      %880 = vmatmul.mubr.f32.gmra.mrb[0].mxu0 %v729
      %v881 = vpop.f32.mrb[0].mxu0
      %v882 = vadd.f32 %v753, %v881
      %v883 = vpop.f32.mrb[0].mxu0
      %884 = vmatprep.mubr.f32.mxu0 0.0
      %885 = vmatmul.mubr.f32.gmra.mrb[0].mxu0 %v730
      %v886 = vpop.f32.mrb[0].mxu0
      %v887 = vadd.f32 %v753, %v886
      %v888 = vpop.f32.mrb[0].mxu0
      %889 = vmatprep.mubr.f32.mxu0 0.0
      %890 = vmatmul.mubr.f32.gmra.mrb[0].mxu0 %v731
      %v891 = vpop.f32.mrb[0].mxu0
      %v892 = vadd.f32 %v753, %v891
      %v893 = vpop.f32.mrb[0].mxu0
      %894 = vmatprep.mubr.f32.mxu0 0.0
      %895 = vmatmul.mubr.f32.gmra.mrb[0].mxu0 %v732
      %v896 = vpop.f32.mrb[0].mxu0
      %v897 = vadd.f32 %v753, %v896
      %v898 = vpop.f32.mrb[0].mxu0
      %899 = vmatprep.mubr.f32.mxu0 0.0
      %900 = vmatmul.mubr.f32.gmra.mrb[0].mxu0 %v733
      %v901 = vpop.f32.mrb[0].mxu0
      %v902 = vadd.f32 %v753, %v901
      %v903 = vpop.f32.mrb[0].mxu0
      %904 = vmatprep.mubr.f32.mxu0 0.0
      %905 = vmatmul.mubr.f32.gmra.mrb[0].mxu0 %v734
      %v906 = vpop.f32.mrb[0].mxu0
      %v907 = vadd.f32 %v753, %v906
      %v908 = vpop.f32.mrb[0].mxu0
      %909 = vmatprep.mubr.f32.mxu0 0.0
      %910 = vmatmul.mubr.f32.gmra.mrb[0].mxu0 %v735
      %v911 = vpop.f32.mrb[0].mxu0
      %v912 = vadd.f32 %v753, %v911
      %v913 = vpop.f32.mrb[0].mxu0
      %914 = vmatprep.mubr.f32.mxu0 0.0
      %915 = vmatmul.mubr.f32.gmra.mrb[0].mxu0 %v736
      %v916 = vpop.f32.mrb[0].mxu0
      %v917 = vadd.f32 %v753, %v916
      %v918 = vpop.f32.mrb[0].mxu0
      %919 = vmatprep.mubr.f32.mxu0 0.0
      %920 = vmatmul.mubr.f32.gmra.mrb[0].mxu0 %v737
      %v921 = vpop.f32.mrb[0].mxu0
      %v922 = vadd.f32 %v753, %v921
      %v923 = vpop.f32.mrb[0].mxu0
      %924 = vmatprep.mubr.f32.mxu0 0.0
      %925 = vmatmul.mubr.f32.gmra.mrb[0].mxu0 %v738
      %v926 = vpop.f32.mrb[0].mxu0
      %v927 = vadd.f32 %v753, %v926
      %v928 = vpop.f32.mrb[0].mxu0
      %929 = vmatprep.mubr.f32.mxu0 0.0
      %930 = vmatmul.mubr.f32.gmra.mrb[0].mxu0 %v739
      %v931 = vpop.f32.mrb[0].mxu0
      %v932 = vadd.f32 %v753, %v931
      %v933 = vpop.f32.mrb[0].mxu0
      %934 = vmatprep.mubr.f32.mxu0 0.0
      %935 = vmatmul.mubr.f32.gmra.mrb[0].mxu0 %v740
      %v936 = vpop.f32.mrb[0].mxu0
      %v937 = vadd.f32 %v753, %v936
      %v938 = vpop.f32.mrb[0].mxu0
      %939 = vmatprep.mubr.f32.mxu0 0.0
      %940 = vmatmul.mubr.f32.gmra.mrb[0].mxu0 %v741
      %v941 = vpop.f32.mrb[0].mxu0
      %v942 = vadd.f32 %v753, %v941
      %v943 = vpop.f32.mrb[0].mxu0
      %944 = vmatprep.mubr.f32.mxu0 0.0
      %945 = vmatmul.mubr.f32.gmra.mrb[0].mxu0 %v742
      %v946 = vpop.f32.mrb[0].mxu0
      %v947 = vadd.f32 %v753, %v946
      %v948 = vpop.f32.mrb[0].mxu0
      %949 = vmatprep.mubr.f32.mxu0 0.0
      %950 = vmatmul.mubr.f32.gmra.mrb[0].mxu0 %v743
      %v951 = vpop.f32.mrb[0].mxu0
      %v952 = vadd.f32 %v753, %v951
      %v953 = vpop.f32.mrb[0].mxu0
      %954 = vmatprep.mubr.f32.mxu0 0.0
      %955 = vmatmul.mubr.f32.gmra.mrb[0].mxu0 %v744
      %v956 = vpop.f32.mrb[0].mxu0
      %v957 = vadd.f32 %v753, %v956
      %v958 = vpop.f32.mrb[0].mxu0
      %959 = vmatprep.mubr.f32.mxu0 0.0
      %960 = vmatmul.mubr.f32.gmra.mrb[0].mxu0 %v745
      %v961 = vpop.f32.mrb[0].mxu0
      %v962 = vadd.f32 %v753, %v961
      %v963 = vpop.f32.mrb[0].mxu0
      %964 = vmatprep.mubr.f32.mxu0 0.0
      %965 = vmatmul.mubr.f32.gmra.mrb[0].mxu0 %v746
      %v966 = vpop.f32.mrb[0].mxu0
      %v967 = vadd.f32 %v753, %v966
      %v968 = vpop.f32.mrb[0].mxu0
      %969 = vmatprep.mubr.f32.mxu0 0.0
      %970 = vmatmul.mubr.f32.gmra.mrb[0].mxu0 %v747
      %v971 = vpop.f32.mrb[0].mxu0
      %v972 = vadd.f32 %v753, %v971
      %v973 = vpop.f32.mrb[0].mxu0
      %974 = vmatprep.mubr.f32.mxu0 0.0
      %975 = vmatmul.mubr.f32.gmra.mrb[0].mxu0 %v748
      %v976 = vpop.f32.mrb[0].mxu0
      %v977 = vadd.f32 %v753, %v976
      %v978 = vpop.f32.mrb[0].mxu0
      %979 = vdwg.mxu0
      %v980 = vmax.f32 %v822, 0.0
      %v981 = vmax.f32 %v827, 0.0
      %v982 = vmax.f32 %v832, 0.0
      %v983 = vmax.f32 %v837, 0.0
      %v984 = vmax.f32 %v842, 0.0
      %v985 = vmax.f32 %v847, 0.0
      %v986 = vmax.f32 %v852, 0.0
      %v987 = vmax.f32 %v857, 0.0
      %v988 = vmax.f32 %v862, 0.0
      %v989 = vmax.f32 %v867, 0.0
      %v990 = vmax.f32 %v872, 0.0
      %v991 = vmax.f32 %v877, 0.0
      %v992 = vmax.f32 %v882, 0.0
      %v993 = vmax.f32 %v887, 0.0
      %v994 = vmax.f32 %v892, 0.0
      %v995 = vmax.f32 %v897, 0.0
      %v996 = vmax.f32 %v902, 0.0
      %v997 = vmax.f32 %v907, 0.0
      %v998 = vmax.f32 %v912, 0.0
      %v999 = vmax.f32 %v917, 0.0
      %v1000 = vmax.f32 %v922, 0.0
      %v1001 = vmax.f32 %v927, 0.0
      %v1002 = vmax.f32 %v932, 0.0
      %v1003 = vmax.f32 %v937, 0.0
      %v1004 = vmax.f32 %v942, 0.0
      %v1005 = vmax.f32 %v947, 0.0
      %v1006 = vmax.f32 %v952, 0.0
      %v1007 = vmax.f32 %v957, 0.0
      %v1008 = vmax.f32 %v962, 0.0
      %v1009 = vmax.f32 %v967, 0.0
      %v1010 = vmax.f32 %v972, 0.0
      %v1011 = vmax.f32 %v977, 0.0
      %v1012 = vsub.f32 %v980, %v996
      %v1013 = vsub.f32 %v981, %v997
      %v1014 = vsub.f32 %v982, %v998
      %v1015 = vsub.f32 %v983, %v999
      %v1016 = vsub.f32 %v984, %v1000
      %v1017 = vsub.f32 %v985, %v1001
      %v1018 = vsub.f32 %v986, %v1002
      %v1019 = vsub.f32 %v987, %v1003
      %v1020 = vsub.f32 %v988, %v1004
      %v1021 = vsub.f32 %v989, %v1005
      %v1022 = vsub.f32 %v990, %v1006
      %v1023 = vsub.f32 %v991, %v1007
      %v1024 = vsub.f32 %v992, %v1008
      %v1025 = vsub.f32 %v993, %v1009
      %v1026 = vsub.f32 %v994, %v1010
      %v1027 = vsub.f32 %v995, %v1011
      %v1029 = vlaneseq
      %v1030 = vshrl.u32 %v1029, 7
      %v1031 = vsub.s32 0, %v1030
      %v1032 = vrot.slane %v355, %v1031
      %v1034 = vmul.f32 %v1012, %v1032
      %v1035 = vmul.f32 %v1013, %v1032
      %v1036 = vmul.f32 %v1014, %v1032
      %v1037 = vmul.f32 %v1015, %v1032
      %v1038 = vmul.f32 %v1016, %v1032
      %v1039 = vmul.f32 %v1017, %v1032
      %v1040 = vmul.f32 %v1018, %v1032
      %v1041 = vmul.f32 %v1019, %v1032
      %v1042 = vmul.f32 %v1020, %v1032
      %v1043 = vmul.f32 %v1021, %v1032
      %v1044 = vmul.f32 %v1022, %v1032
      %v1045 = vmul.f32 %v1023, %v1032
      %v1046 = vmul.f32 %v1024, %v1032
      %v1047 = vmul.f32 %v1025, %v1032
      %v1048 = vmul.f32 %v1026, %v1032
      %v1049 = vmul.f32 %v1027, %v1032
      %vm1050 = vcmask 523264
      %v1051 = vsel %vm1050, %v1034, 0.0
      %1052 = vadd.xlane.f32.xlu0 %v1051
      %v1053 = vpop.xlane.xlu0 %1052
      %v1054 = vsel %vm1050, %v1035, 0.0
      %1055 = vadd.xlane.f32.xlu0 %v1054
      %v1056 = vpop.xlane.xlu0 %1055
      %v1057 = vsel %vm1050, %v1036, 0.0
      %1058 = vadd.xlane.f32.xlu0 %v1057
      %v1059 = vpop.xlane.xlu0 %1058
      %v1060 = vsel %vm1050, %v1037, 0.0
      %1061 = vadd.xlane.f32.xlu0 %v1060
      %v1062 = vpop.xlane.xlu0 %1061
      %v1063 = vsel %vm1050, %v1038, 0.0
      %1064 = vadd.xlane.f32.xlu0 %v1063
      %v1065 = vpop.xlane.xlu0 %1064
      %v1066 = vsel %vm1050, %v1039, 0.0
      %1067 = vadd.xlane.f32.xlu0 %v1066
      %v1068 = vpop.xlane.xlu0 %1067
      %v1069 = vsel %vm1050, %v1040, 0.0
      %1070 = vadd.xlane.f32.xlu0 %v1069
      %v1071 = vpop.xlane.xlu0 %1070
      %v1072 = vsel %vm1050, %v1041, 0.0
      %1073 = vadd.xlane.f32.xlu0 %v1072
      %v1074 = vpop.xlane.xlu0 %1073
      %v1075 = vsel %vm1050, %v1042, 0.0
      %1076 = vadd.xlane.f32.xlu0 %v1075
      %v1077 = vpop.xlane.xlu0 %1076
      %v1078 = vsel %vm1050, %v1043, 0.0
      %1079 = vadd.xlane.f32.xlu0 %v1078
      %v1080 = vpop.xlane.xlu0 %1079
      %v1081 = vsel %vm1050, %v1044, 0.0
      %1082 = vadd.xlane.f32.xlu0 %v1081
      %v1083 = vpop.xlane.xlu0 %1082
      %v1084 = vsel %vm1050, %v1045, 0.0
      %1085 = vadd.xlane.f32.xlu0 %v1084
      %v1086 = vpop.xlane.xlu0 %1085
      %v1087 = vsel %vm1050, %v1046, 0.0
      %1088 = vadd.xlane.f32.xlu0 %v1087
      %v1089 = vpop.xlane.xlu0 %1088
      %v1090 = vsel %vm1050, %v1047, 0.0
      %1091 = vadd.xlane.f32.xlu0 %v1090
      %v1092 = vpop.xlane.xlu0 %1091
      %v1093 = vsel %vm1050, %v1048, 0.0
      %1094 = vadd.xlane.f32.xlu0 %v1093
      %v1095 = vpop.xlane.xlu0 %1094
      %v1096 = vsel %vm1050, %v1049, 0.0
      %1097 = vadd.xlane.f32.xlu0 %v1096
      %v1098 = vpop.xlane.xlu0 %1097
      %v1100 = vlaneseq
      %v1101 = vshrl.u32 %v1100, 7
      %v1102 = vsub.s32 0, %v1101
      %v1103 = vrot.slane %v356, %v1102
      %v1105 = vadd.f32 %v1053, %v1103
      %v1106 = vadd.f32 %v1056, %v1103
      %v1107 = vadd.f32 %v1059, %v1103
      %v1108 = vadd.f32 %v1062, %v1103
      %v1109 = vadd.f32 %v1065, %v1103
      %v1110 = vadd.f32 %v1068, %v1103
      %v1111 = vadd.f32 %v1071, %v1103
      %v1112 = vadd.f32 %v1074, %v1103
      %v1113 = vadd.f32 %v1077, %v1103
      %v1114 = vadd.f32 %v1080, %v1103
      %v1115 = vadd.f32 %v1083, %v1103
      %v1116 = vadd.f32 %v1086, %v1103
      %v1117 = vadd.f32 %v1089, %v1103
      %v1118 = vadd.f32 %v1092, %v1103
      %v1119 = vadd.f32 %v1095, %v1103
      %v1120 = vadd.f32 %v1098, %v1103
      %vm1121 = vcmask 7168
      %1122 = vst.msk [vmem:[%s331] sm:$0xff] %vm1121, %v1105
      %1123 = vst.msk [vmem:[%s331 + $0x8] sm:$0xff] %vm1121, %v1106
      %1124 = vst.msk [vmem:[%s331 + $0x10] sm:$0xff] %vm1121, %v1107
      %1125 = vst.msk [vmem:[%s331 + $0x18] sm:$0xff] %vm1121, %v1108
      %1126 = vst.msk [vmem:[%s331 + $0x20] sm:$0xff] %vm1121, %v1109
      %1127 = vst.msk [vmem:[%s331 + $0x28] sm:$0xff] %vm1121, %v1110
      %1128 = vst.msk [vmem:[%s331 + $0x30] sm:$0xff] %vm1121, %v1111
      %1129 = vst.msk [vmem:[%s331 + $0x38] sm:$0xff] %vm1121, %v1112
      %1130 = vst.msk [vmem:[%s331 + $0x40] sm:$0xff] %vm1121, %v1113
      %1131 = vst.msk [vmem:[%s331 + $0x48] sm:$0xff] %vm1121, %v1114
      %1132 = vst.msk [vmem:[%s331 + $0x50] sm:$0xff] %vm1121, %v1115
      %1133 = vst.msk [vmem:[%s331 + $0x58] sm:$0xff] %vm1121, %v1116
      %1134 = vst.msk [vmem:[%s331 + $0x60] sm:$0xff] %vm1121, %v1117
      %1135 = vst.msk [vmem:[%s331 + $0x68] sm:$0xff] %vm1121, %v1118
      %1136 = vst.msk [vmem:[%s331 + $0x70] sm:$0xff] %vm1121, %v1119
      %1137 = vst.msk [vmem:[%s331 + $0x78] sm:$0xff] %vm1121, %v1120
      %s1138 = smul.u32 16, %s21
      %p1139 = scmp.lt.s32.totalorder %s1138, 31
      %s1140 = scalar_select %p1139, %s1138, 31
      %s1141 = smul.addr %s1140, 8
      %s1142 = scalar_lea.vmem %s8, %s1141
      // Predicated region
      $region53: #{tpu_custom_call.1} parent=51 // pred_check
        %p1143 = pneg %p217
      $region54: #{tpu_custom_call.1} parent=51 // pred_check_branch
        %1145 = sbr.rel (%p1143) target = $region56
      $region55: #{tpu_custom_call.1} parent=51 // pred_region
        %s1146 = smul.u32 16, %s21
      $region56: #{tpu_custom_call.1} parent=51 // pred_fallthru
        _
    $region52: #{tpu_custom_call.1} parent=5 // pred_fallthru
      _
    %p1147 = scmp.le.s32.totalorder 2, %s16
    // Predicated region
    $region57: #{tpu_custom_call.1} parent=5 // pred_check
      %p1148 = pneg %p1147
    $region58: #{tpu_custom_call.1} parent=5 // pred_check_branch
      %1150 = sbr.rel (%p1148) target = $region60
    $region59: #{tpu_custom_call.1} parent=5 // pred_region
      %s1151 = ssub.s32 %s16, 2
      // Predicated region
      $region61: #{tpu_custom_call.1} parent=59 // pred_check
        %p1152 = pneg %p223
      $region62: #{tpu_custom_call.1} parent=59 // pred_check_branch
        %1154 = sbr.rel (%p1152) target = $region64
      $region63: #{tpu_custom_call.1} parent=59 // pred_region
        %s1155 = smul.u32 16, %s22
        %p1156 = scmp.lt.s32.totalorder %s1155, 31
        %s1157 = scalar_select %p1156, %s1155, 31
        %s1158 = smul.addr %s1157, 8
        %s1159 = scalar_lea.vmem %s8, %s1158
      $region64: #{tpu_custom_call.1} parent=59 // pred_fallthru
        _
    $region60: #{tpu_custom_call.1} parent=5 // pred_fallthru
      _
  $region6: #{tpu_custom_call.1} parent=0 // loop_footer
    %s20 = sadd.s32 1, %s16
  $region7: #{tpu_custom_call.1} parent=0 // loop_footer_branch
    %15 = sbr.rel target = $region3
  $region8: #{tpu_custom_call.1} parent=0 // loop_exit
    _

</llo_original>
